<compile_context>
chip_gen: v7x
topology: tpu7x:2x2x1
jax: 0.10.0
libtpu: 0.0.40
codegen_flags: <defaults>
</compile_context>

<pallas_src>
import jax
import jax.numpy as jnp
from jax.experimental import pallas as pl
from jax.experimental.pallas import tpu as pltpu

_LANES = 128          # f32 lane width of a vreg row
_SUBLANES = 8         # f32 sublane count
_TARGET_ROWS = 1024   # 128-wide rows per tile (~512 KiB / input block, ~16K edges)


def _round_up(x, m):
    return ((x + m - 1) // m) * m


def edge_combine_kernel(gu_ref, gv_ref, b_ref, out_ref):
    # One lane-dense edge tile:  score = Pu[src] + Pv[dst] + b
    out_ref[...] = gu_ref[...] + gv_ref[...] + b_ref[...]


def mlp_predictor_forward(src_idx, dst_idx, h_user, h_item, W, b):
    """Pallas implementation of MLPPredictor.forward.

    src_idx, dst_idx : (E,) int32 edge endpoints (src = user node, dst = item node)
    h_user           : (N_user, F0) float32
    h_item           : (N_item, F1) float32
    W                : (C, F0 + F1) float32  (torch.nn.Linear weight layout)
    b                : (C,) float32
    returns          : (E, C) float32 per-edge scores
    """
    E = src_idx.shape[0]
    F0 = h_user.shape[1]
    C = W.shape[0]

    # --- node-level projections: N-proportional glue (tiny dense matmuls). ---
    # einsum contracts against W's layout directly -> no materialized transpose.
    Wu = W[:, :F0]                              # (C, F0)
    Wv = W[:, F0:]                              # (C, F1)
    Pu = jnp.einsum("nf,cf->nc", h_user, Wu)    # (N_user, C)
    Pv = jnp.einsum("mf,cf->mc", h_item, Wv)    # (N_item, C)

    # --- lane-dense packing: PACK consecutive edges share one 128-wide row. ---
    pack = _LANES // C if _LANES % C == 0 else 1
    width = pack * C

    rows = pl.cdiv(E, pack)
    tile_rows = min(_TARGET_ROWS, _round_up(rows, _SUBLANES))
    rows_pad = _round_up(rows, tile_rows)
    e_pad = rows_pad * pack

    # Handle ragged E by padding the cheap int32 index streams (index 0 is a
    # valid row), not the gathered feature arrays; padded rows are sliced off.
    src_p = jnp.pad(src_idx, (0, e_pad - E))
    dst_p = jnp.pad(dst_idx, (0, e_pad - E))

    # Per-edge gather of the projected node scores (only C=8 f32 per edge now).
    # TODO(synk): fuse this gather into the kernel (scalar-prefetched indices +
    # in-kernel dynamic gather / DMA) to also drop the intermediate (E, C) HBM streams.
    gu = jnp.take(Pu, src_p, axis=0).reshape(rows_pad, width)
    gv = jnp.take(Pv, dst_p, axis=0).reshape(rows_pad, width)
    b_packed = jnp.tile(b, pack).reshape(1, width)

    tile_spec = pl.BlockSpec((tile_rows, width), lambda i: (i, 0))

    out = pl.pallas_call(
        edge_combine_kernel,
        out_shape=jax.ShapeDtypeStruct((rows_pad, width), jnp.float32),
        grid=(rows_pad // tile_rows,),
        in_specs=[
            tile_spec,                                   # Pu[src] edge tile
            tile_spec,                                   # Pv[dst] edge tile
            pl.BlockSpec((1, width), lambda i: (0, 0)),  # bias, VMEM-resident
        ],
        out_specs=tile_spec,
        compiler_params=pltpu.CompilerParams(
            dimension_semantics=("parallel",),           # megacore split on v7x
            vmem_limit_bytes=32 * 1024 * 1024,
        ),
    )(gu, gv, b_packed)

    return out.reshape(e_pad, C)[:E]


if __name__ == "__main__":
    key = jax.random.PRNGKey(0)
    k_wu, k_wi, k_hw, k_hb, k_src, k_dst = jax.random.split(key, 6)

    # Small synthetic "graph": 4 user nodes, 5 item nodes, 8 edges.
    in_features_0 = 16   # user feature dim
    in_features_1 = 16   # item feature dim
    out_classes = 8
    n_user, n_item, n_edges = 4, 5, 8

    h_user = jax.random.normal(k_wu, (n_user, in_features_0), dtype=jnp.float32)
    h_item = jax.random.normal(k_wi, (n_item, in_features_1), dtype=jnp.float32)

    # Deterministic Linear params (torch.nn.Linear-style uniform init).
    fan_in = in_features_0 + in_features_1
    bound = 1.0 / (fan_in ** 0.5)
    W = jax.random.uniform(k_hw, (out_classes, fan_in), jnp.float32, -bound, bound)
    b = jax.random.uniform(k_hb, (out_classes,), jnp.float32, -bound, bound)

    src_idx = jax.random.randint(k_src, (n_edges,), 0, n_user, dtype=jnp.int32)
    dst_idx = jax.random.randint(k_dst, (n_edges,), 0, n_item, dtype=jnp.int32)

    score = mlp_predictor_forward(src_idx, dst_idx, h_user, h_item, W, b)
    score = jax.block_until_ready(score)

    # Reference check against plain JAX (concat + dense), same semantics as torch.
    ref = jnp.concatenate([h_user[src_idx], h_item[dst_idx]], axis=1) @ W.T + b
    assert score.shape == (n_edges, out_classes)
    assert jnp.allclose(score, ref, atol=1e-5, rtol=1e-5)

    print("KERNEL_OK")
</pallas_src>

<mosaic_0001>
module attributes {stable_mosaic.version = 11 : i64} {
  func.func @edge_combine_kernel(%arg0: i32, %arg1: memref<8x128xf32, #tpu.memory_space<vmem>>, %arg2: memref<8x128xf32, #tpu.memory_space<vmem>>, %arg3: memref<1x128xf32, #tpu.memory_space<vmem>>, %arg4: memref<8x128xf32, #tpu.memory_space<vmem>>) attributes {dimension_semantics = [#tpu.dimension_semantics<parallel>], iteration_bounds = array<i64: 1>, scalar_prefetch = 0 : i64, scratch_operands = 0 : i64, tpu.core_type = #tpu.core_type<tc>, window_params = [{transform_indices = @transform_0, window_bounds = array<i64: 8, 128>}, {transform_indices = @transform_1, window_bounds = array<i64: 8, 128>}, {pipeline_mode = #tpu.pipeline_mode<synchronous>, transform_indices = @transform_2, window_bounds = array<i64: 1, 128>}, {transform_indices = @transform_3, window_bounds = array<i64: 8, 128>}]} {
    %c0 = arith.constant 0 : index
    %c0_0 = arith.constant 0 : index
    %0 = vector.load %arg1[%c0, %c0_0] : memref<8x128xf32, #tpu.memory_space<vmem>>, vector<8x128xf32>
    %c0_1 = arith.constant 0 : index
    %c0_2 = arith.constant 0 : index
    %1 = vector.load %arg2[%c0_1, %c0_2] : memref<8x128xf32, #tpu.memory_space<vmem>>, vector<8x128xf32>
    %2 = arith.addf %0, %1 : vector<8x128xf32>
    %c0_3 = arith.constant 0 : index
    %c0_4 = arith.constant 0 : index
    %3 = vector.load %arg3[%c0_3, %c0_4] : memref<1x128xf32, #tpu.memory_space<vmem>>, vector<1x128xf32>
    %4 = vector.broadcast %3 : vector<1x128xf32> to vector<8x128xf32>
    %5 = arith.addf %2, %4 : vector<8x128xf32>
    %c0_5 = arith.constant 0 : index
    %c0_6 = arith.constant 0 : index
    %6 = vector.load %arg4[%c0_5, %c0_6] : memref<8x128xf32, #tpu.memory_space<vmem>>, vector<8x128xf32>
    tpu.vector_store %arg4[%c0_5, %c0_6], %5 {strides = array<i32>} : memref<8x128xf32, #tpu.memory_space<vmem>>, vector<8x128xf32>,
    return
  }
  func.func @transform_0(%arg0: i32) -> (i32, i32) {
    %c0_i32 = arith.constant 0 : i32
    %c0_i32_0 = arith.constant 0 : i32
    return %arg0, %c0_i32 : i32, i32
  }
  func.func @transform_1(%arg0: i32) -> (i32, i32) {
    %c0_i32 = arith.constant 0 : i32
    %c0_i32_0 = arith.constant 0 : i32
    return %arg0, %c0_i32 : i32, i32
  }
  func.func @transform_2(%arg0: i32) -> (i32, i32) {
    %c0_i32 = arith.constant 0 : i32
    %c0_i32_0 = arith.constant 0 : i32
    %c0_i32_1 = arith.constant 0 : i32
    return %c0_i32, %c0_i32_0 : i32, i32
  }
  func.func @transform_3(%arg0: i32) -> (i32, i32) {
    %c0_i32 = arith.constant 0 : i32
    %c0_i32_0 = arith.constant 0 : i32
    return %arg0, %c0_i32 : i32, i32
  }
}

</mosaic_0001>

<llo_original>
// kernel: tpu_custom_call.1
$region0: #{tpu_custom_call.1}
  #allocation0 [shape = 'u32[]', space=smem, size = 0x4, offset = 0x4, fixed_abs, tag = 'smem constant byte address 0x4 - core index']
  #allocation1 [shape = 'u32[144,128]{1,0:T(1,128)}', space=vmem, size = 0x12000, scoped, tag = 'internal scratch']
  %s0 = inlined_call_operand.hbm [shape: f32[8,128], index: 0, kind: input, shape index: {}]
  %s1 = inlined_call_operand.hbm [shape: f32[8,128], index: 1, kind: input, shape index: {}]
  %s2 = inlined_call_operand.vmem [shape: f32[1,128], index: 2, kind: input, shape index: {}]
  %s3 = inlined_call_operand.hbm [shape: f32[8,128], index: 3, kind: output, shape index: {}]
  %s4 = sld [smem:[#allocation0]]
  $region30: #{tpu_custom_call.1} parent=0
    _
  %s6 = ssub.s32 1, %s4
  %s7 = scalar_select 0, %s6, %s4
  $region1: #{tpu_custom_call.1} parent=0
    #allocation2 [shape = 'u8[4096]{0}', space=vmem, size = 0x1000, scoped, tag = 'input window, operand 0, single buffered']
    #allocation3 [shape = 's32[1]{0}', space=sflag, size = 0x4, scoped, tag = 'scoped memory for tpu_custom_call.1']
    #allocation4 [shape = 's32[1]{0}', space=sflag, size = 0x4, scoped, tag = 'scoped memory for tpu_custom_call.1']
    #allocation5 [shape = 'u8[4096]{0}', space=vmem, size = 0x1000, scoped, tag = 'input window, operand 1, single buffered']
    #allocation6 [shape = 's32[1]{0}', space=sflag, size = 0x4, scoped, tag = 'scoped memory for tpu_custom_call.1']
    #allocation7 [shape = 'u8[4096]{0}', space=vmem, size = 0x1000, scoped, tag = 'output window, operand 0, single buffered']
    %8 = vsyncpa [#allocation3], 0
    %9 = vsyncpa [#allocation6], 0
    %10 = vsyncpa [#allocation4], 0
    // Predicated region
    $region2: #{tpu_custom_call.1} parent=1 // pred_check
      _
    $region3: #{tpu_custom_call.1} parent=1 // pred_check_branch
      %12 = sbr.rel (0) target = $region5
    $region4: #{tpu_custom_call.1} parent=1 // pred_region
      %s14 = ssub.s32 128, 128
      %15 = vsyncadd [#allocation3], %s14
      %s17 = sshll.u32 [#allocation2], 4
      %s18 = int_to_ptr.vmem [resolvable:$true] %s17
      %20 = dma.hbm_to_vmem [thread:$0]  %s0, 128, %s18, [#allocation3]
    $region5: #{tpu_custom_call.1} parent=1 // pred_fallthru
      _
    // Predicated region
    $region6: #{tpu_custom_call.1} parent=1 // pred_check
      _
    $region7: #{tpu_custom_call.1} parent=1 // pred_check_branch
      %22 = sbr.rel (0) target = $region9
    $region8: #{tpu_custom_call.1} parent=1 // pred_region
      %s24 = ssub.s32 128, 128
      %25 = vsyncadd [#allocation6], %s24
      %s27 = sshll.u32 [#allocation5], 4
      %s28 = int_to_ptr.vmem [resolvable:$true] %s27
      %30 = dma.hbm_to_vmem [thread:$0]  %s1, 128, %s28, [#allocation6]
    $region9: #{tpu_custom_call.1} parent=1 // pred_fallthru
      _
    // Predicated region
    $region10: #{tpu_custom_call.1} parent=1 // pred_check
      _
    $region11: #{tpu_custom_call.1} parent=1 // pred_check_branch
      %32 = sbr.rel (0) target = $region13
    $region12: #{tpu_custom_call.1} parent=1 // pred_region
      _
    $region13: #{tpu_custom_call.1} parent=1 // pred_fallthru
      _
    // Predicated region
    $region14: #{tpu_custom_call.1} parent=1 // pred_check
      _
    $region15: #{tpu_custom_call.1} parent=1 // pred_check_branch
      %34 = sbr.rel (0) target = $region17
    $region16: #{tpu_custom_call.1} parent=1 // pred_region
      %35 = dma.done [#allocation3], 128
    $region17: #{tpu_custom_call.1} parent=1 // pred_fallthru
      _
    // Predicated region
    $region18: #{tpu_custom_call.1} parent=1 // pred_check
      _
    $region19: #{tpu_custom_call.1} parent=1 // pred_check_branch
      %37 = sbr.rel (0) target = $region21
    $region20: #{tpu_custom_call.1} parent=1 // pred_region
      %38 = dma.done [#allocation6], 128
    $region21: #{tpu_custom_call.1} parent=1 // pred_fallthru
      _
    %v39 = vld [vmem:[#allocation2] sm:$0xff]
    %v40 = vld [vmem:[#allocation5] sm:$0xff]
    %v41 = vadd.f32 %v39, %v40
    %v42 = vld [vmem:[%s2] sm:$0x1]
    %v44 = vlaneseq
    %v45 = vshrl.u32 %v44, 7
    %v46 = vsub.s32 0, %v45
    %v47 = vrot.slane %v42, %v46
    %v49 = vadd.f32 %v41, %v47
    %50 = vst [vmem:[#allocation7] sm:$0xff] %v49
    // Predicated region
    $region22: #{tpu_custom_call.1} parent=1 // pred_check
      _
    $region23: #{tpu_custom_call.1} parent=1 // pred_check_branch
      %52 = sbr.rel (0) target = $region25
    $region24: #{tpu_custom_call.1} parent=1 // pred_region
      %s54 = ssub.s32 128, 128
      %55 = vsyncadd [#allocation4], %s54
      %s57 = sshll.u32 [#allocation7], 4
      %s58 = int_to_ptr.vmem [resolvable:$true] %s57
      %60 = dma.vmem_to_hbm [thread:$0]  %s58, 128, %s3, [#allocation4]
    $region25: #{tpu_custom_call.1} parent=1 // pred_fallthru
      _
    // Predicated region
    $region26: #{tpu_custom_call.1} parent=1 // pred_check
      _
    $region27: #{tpu_custom_call.1} parent=1 // pred_check_branch
      %62 = sbr.rel (0) target = $region29
    $region28: #{tpu_custom_call.1} parent=1 // pred_region
      %63 = dma.done [#allocation4], 128
    $region29: #{tpu_custom_call.1} parent=1 // pred_fallthru
      _
    %64 = vsyncpa [#allocation3], 1
    %65 = vsyncpa [#allocation6], 1
    %66 = vsyncpa [#allocation4], 1

</llo_original>
